<compile_context>
chip_gen: v6e
topology: v6e:2x2x1
jax: 0.10.0
libtpu: 0.0.40
codegen_flags: <defaults>
</compile_context>

<pallas_src>
import math

import jax
import jax.numpy as jnp
from jax.experimental import pallas as pl
from jax.experimental.pallas import tpu as pltpu

_LANE = 128


def _add_pe_kernel(x_ref, pe_ref, o_ref):
    # x_ref : (TB, SUB, TC) [dense path]  or (TB, TC) [fallback]
    # pe_ref: (SUB, TC)                   or (1,  TC)
    # Trailing-dim broadcast add over the batch-tile axis; pure VPU work.
    o_ref[...] = x_ref[...] + pe_ref[...]


def _round_down(v, m):
    return (v // m) * m


def _vmem_budgets(target_block_bytes, vmem_limit_bytes):
    """Derive tile size / scoped-VMEM limit from the actual chip."""
    if target_block_bytes is not None and vmem_limit_bytes is not None:
        return target_block_bytes, vmem_limit_bytes
    vmem_cap = 128 << 20
    try:
        vmem_cap = int(pltpu.get_tpu_info().vmem_capacity_bytes)
    except Exception:
        pass  # interpret mode / old jax: assume the larger (v5e/v6e) capacity
    if vmem_limit_bytes is None:
        # v7x (64 MiB/TC) -> 48 MiB scoped limit; v5e/v6e (128 MiB) -> 64 MiB.
        vmem_limit_bytes = min(64 << 20, (vmem_cap * 3) // 4)
    if target_block_bytes is None:
        # v7x: big tiles so the ~0.35us fixed per-grid-step cost is noise against
        # ~3.2 TB/s streaming; v5e/v6e: ~2 MiB already sits at ~85% of roofline.
        target_block_bytes = (4 << 20) if vmem_cap <= (64 << 20) else (2 << 20)
    return target_block_bytes, vmem_limit_bytes


def _pick_tiles_dense(batch, sub, cols, itemsize, target_bytes, vmem_limit):
    """Tiles for the (B, SUB, C) layout: x block = (tb, sub, tc), pe = (sub, tc).
    All blocks are physically dense, so the VMEM footprint below is exact."""
    if cols <= _LANE:
        tc = cols
    else:
        tc = min(cols, max(_LANE, _round_down(target_bytes // (sub * itemsize), _LANE)))
    tb = max(1, min(batch, target_bytes // max(1, sub * tc * itemsize)))

    # Exact double-buffered footprint: 2 x-buffers + 2 out-buffers + 2 pe-buffers.
    def footprint(tb_, tc_):
        return (2 * 2 * tb_ * sub * tc_ + 2 * sub * tc_) * itemsize

    budget = (vmem_limit * 3) // 4  # headroom for Mosaic internal scratch
    while footprint(tb, tc) > budget and tb > 1:
        tb = max(1, tb // 2)
    while footprint(tb, tc) > budget and tc > _LANE:
        tc = max(_LANE, _round_down(tc // 2, _LANE))

    # v7x megacore: if the whole grid collapsed to a single block, split the
    # chunk axis so both TensorCores get work (pe-per-core residency preserved).
    if pl.cdiv(cols, tc) == 1 and pl.cdiv(batch, tb) == 1 and cols >= 2 * _LANE:
        tc = max(_LANE, _round_down(cols // 2, _LANE))
    return tb, tc


def _pick_tiles_padded(batch, sub, total, itemsize, target_bytes, vmem_limit):
    """Tiles for the 2-D (B, S*D)+(1, S*D) fallback.  Accounts for sublane
    padding: a (tb, tc) block with tb < sub is physically padded to sub rows,
    and the (1, tc) pe block always is."""
    tb = batch if batch <= sub else min(_round_down(batch, sub), 128)
    tb_pad = -(-tb // sub) * sub
    if total <= _LANE:
        tc = total
    else:
        tc = min(total, max(_LANE, _round_down(target_bytes // (tb_pad * itemsize), _LANE)))

    def footprint(tc_):
        return (2 * 2 * tb_pad * tc_ + 2 * sub * tc_) * itemsize

    budget = (vmem_limit * 3) // 4
    while footprint(tc) > budget and tc > _LANE:
        tc = max(_LANE, _round_down(tc // 2, _LANE))

    if pl.cdiv(total, tc) == 1 and pl.cdiv(batch, tb) == 1 and total >= 2 * _LANE:
        tc = max(_LANE, _round_down(total // 2, _LANE))
    return tb, tc


def positional_encoding(x, pe_table, *, target_block_bytes=None,
                        vmem_limit_bytes=None, donate_x=False):
    """Eval-mode PositionalEncoding.forward: x + pe_table[:S].

    x        : (B, S, D)
    pe_table : (>=S, D), ideally built once in x.dtype (make_pe(..., dtype=...))
               so the cast is hoisted out of the per-call path.
    """
    B, S, D = x.shape
    total = S * D
    dtype = x.dtype
    itemsize = jnp.dtype(dtype).itemsize
    sub = max(8, 32 // itemsize)  # sublane multiple: 8 f32 / 16 bf16 / 32 int8

    target_block_bytes, vmem_limit_bytes = _vmem_budgets(target_block_bytes,
                                                         vmem_limit_bytes)

    pe = pe_table[:S, :]
    if pe.dtype != dtype:  # fallback only; cache the table pre-cast in practice
        pe = pe.astype(dtype)

    if total % sub == 0:
        # Sublane-dense layout: works for any B, including B == 1 inference.
        C = total // sub
        xk = x.reshape(B, sub, C)
        pek = pe.reshape(sub, C)
        tb, tc = _pick_tiles_dense(B, sub, C, itemsize,
                                   target_block_bytes, vmem_limit_bytes)
        grid = (pl.cdiv(C, tc), pl.cdiv(B, tb))  # batch innermost -> pe stays resident
        in_specs = [pl.BlockSpec((tb, sub, tc), lambda c, b: (b, 0, c)),
                    pl.BlockSpec((sub, tc), lambda c, b: (0, c))]
        out_spec = pl.BlockSpec((tb, sub, tc), lambda c, b: (b, 0, c))
        out_shape = jax.ShapeDtypeStruct((B, sub, C), dtype)
    else:
        # Rare odd-shape fallback: 2-D broadcast layout, padding-aware sizing.
        xk = x.reshape(B, total)
        pek = pe.reshape(1, total)
        tb, tc = _pick_tiles_padded(B, sub, total, itemsize,
                                    target_block_bytes, vmem_limit_bytes)
        grid = (pl.cdiv(total, tc), pl.cdiv(B, tb))
        in_specs = [pl.BlockSpec((tb, tc), lambda c, b: (b, c)),
                    pl.BlockSpec((1, tc), lambda c, b: (0, c))]
        out_spec = pl.BlockSpec((tb, tc), lambda c, b: (b, c))
        out_shape = jax.ShapeDtypeStruct((B, total), dtype)

    cost = pl.CostEstimate(
        flops=B * total,
        transcendentals=0,
        bytes_accessed=(2 * B * total + total) * itemsize,
    )

    out = pl.pallas_call(
        _add_pe_kernel,
        out_shape=out_shape,
        grid_spec=pltpu.PrefetchScalarGridSpec(
            num_scalar_prefetch=0,
            grid=grid,
            in_specs=in_specs,
            out_specs=out_spec,
        ),
        compiler_params=pltpu.CompilerParams(
            dimension_semantics=("parallel", "parallel"),  # megacore-shardable
            vmem_limit_bytes=vmem_limit_bytes,
        ),
        cost_estimate=cost,
        # Optional donation: no HBM-traffic win, just drops the extra output alloc.
        input_output_aliases={0: 0} if donate_x else {},
    )(xk, pek)

    return out.reshape(B, S, D)


def make_pe(seq_len, d_model, dtype=jnp.float32):
    """Sinusoidal table identical to the PyTorch __init__ (handles odd d_model).
    Build once per model/dtype and cache it — hoists the cast out of forward."""
    position = jnp.arange(seq_len, dtype=jnp.float32)[:, None]                  # (S, 1)
    denominator = jnp.exp(
        jnp.arange(0, d_model, 2, dtype=jnp.float32) * (-math.log(10000.0) / d_model)
    )                                                                           # (ceil(D/2),)
    angles = position * denominator                                             # (S, ceil(D/2))
    pe = jnp.zeros((seq_len, d_model), dtype=jnp.float32)
    pe = pe.at[:, 0::2].set(jnp.sin(angles))
    pe = pe.at[:, 1::2].set(jnp.cos(angles[:, : d_model // 2]))
    return pe.astype(dtype)


if __name__ == "__main__":
    # --- module-sized shapes: (batch=2, seq_len=8, d_model=32), f32 ------------
    B, S, D = 2, 8, 32
    dropout_p = 0.1  # identity in eval mode
    key = jax.random.PRNGKey(0)
    x = jax.random.normal(key, (B, S, D), dtype=jnp.float32)
    pe = make_pe(S, D, dtype=jnp.float32)

    out = jax.block_until_ready(positional_encoding(x, pe))
    ref = x + pe[None, :S, :]
    assert out.shape == (B, S, D)
    assert jnp.allclose(out, ref, atol=1e-6, rtol=1e-6)

    # --- tiled path: multiple chunk blocks, pe resident across batch axis ------
    B2, S2, D2 = 16, 64, 128
    x2 = jax.random.normal(jax.random.PRNGKey(1), (B2, S2, D2), dtype=jnp.float32)
    pe2 = make_pe(S2, D2, dtype=jnp.float32)
    out2 = jax.block_until_ready(
        positional_encoding(x2, pe2, target_block_bytes=16 * 1024,
                            vmem_limit_bytes=32 << 20))
    assert jnp.allclose(out2, x2 + pe2[None], atol=1e-6, rtol=1e-6)

    # --- B == 1 small-batch inference (sublane-dense, no padding blowup) -------
    x1 = jax.random.normal(jax.random.PRNGKey(2), (1, S2, D2), dtype=jnp.float32)
    out1 = jax.block_until_ready(positional_encoding(x1, pe2))
    assert jnp.allclose(out1, x1 + pe2[None], atol=1e-6, rtol=1e-6)

    # --- native bf16 path -------------------------------------------------------
    x3 = x2.astype(jnp.bfloat16)
    pe3 = make_pe(S2, D2, dtype=jnp.bfloat16)
    out3 = jax.block_until_ready(positional_encoding(x3, pe3))
    ref3 = x3 + pe3[None]  # same bf16 add as the kernel performs
    assert jnp.allclose(out3.astype(jnp.float32), ref3.astype(jnp.float32),
                        atol=1e-2, rtol=1e-2)

    # --- odd-shape fallback (S*D not divisible by the sublane multiple) --------
    x4 = jax.random.normal(jax.random.PRNGKey(3), (2, 7, 30), dtype=jnp.float32)
    pe4 = make_pe(7, 30, dtype=jnp.float32)
    out4 = jax.block_until_ready(positional_encoding(x4, pe4))
    assert jnp.allclose(out4, x4 + pe4[None], atol=1e-6, rtol=1e-6)

    print("KERNEL_OK")
</pallas_src>

<mosaic_0001>
module attributes {stable_mosaic.version = 11 : i64} {
  func.func @_add_pe_kernel(%arg0: i32, %arg1: i32, %arg2: memref<2x8x32xf32, #tpu.memory_space<vmem>>, %arg3: memref<8x32xf32, #tpu.memory_space<vmem>>, %arg4: memref<2x8x32xf32, #tpu.memory_space<vmem>>) attributes {dimension_semantics = [#tpu.dimension_semantics<parallel>, #tpu.dimension_semantics<parallel>], iteration_bounds = array<i64: 1, 1>, scalar_prefetch = 0 : i64, scratch_operands = 0 : i64, tpu.core_type = #tpu.core_type<tc>, window_params = [{transform_indices = @transform_0, window_bounds = array<i64: 2, 8, 32>}, {transform_indices = @transform_1, window_bounds = array<i64: 8, 32>}, {transform_indices = @transform_2, window_bounds = array<i64: 2, 8, 32>}]} {
    %c0 = arith.constant 0 : index
    %c0_0 = arith.constant 0 : index
    %c0_1 = arith.constant 0 : index
    %0 = vector.load %arg2[%c0, %c0_0, %c0_1] : memref<2x8x32xf32, #tpu.memory_space<vmem>>, vector<2x8x32xf32>
    %c0_2 = arith.constant 0 : index
    %c0_3 = arith.constant 0 : index
    %1 = vector.load %arg3[%c0_2, %c0_3] : memref<8x32xf32, #tpu.memory_space<vmem>>, vector<8x32xf32>
    %2 = vector.shape_cast %1 : vector<8x32xf32> to vector<1x8x32xf32>
    %3 = vector.broadcast %2 : vector<1x8x32xf32> to vector<2x8x32xf32>
    %4 = arith.addf %0, %3 : vector<2x8x32xf32>
    %c0_4 = arith.constant 0 : index
    %c0_5 = arith.constant 0 : index
    %c0_6 = arith.constant 0 : index
    %5 = vector.load %arg4[%c0_4, %c0_5, %c0_6] : memref<2x8x32xf32, #tpu.memory_space<vmem>>, vector<2x8x32xf32>
    tpu.vector_store %arg4[%c0_4, %c0_5, %c0_6], %4 {strides = array<i32>} : memref<2x8x32xf32, #tpu.memory_space<vmem>>, vector<2x8x32xf32>,
    return
  }
  func.func @transform_0(%arg0: i32, %arg1: i32) -> (i32, i32, i32) {
    %c0_i32 = arith.constant 0 : i32
    %c0_i32_0 = arith.constant 0 : i32
    return %arg1, %c0_i32, %arg0 : i32, i32, i32
  }
  func.func @transform_1(%arg0: i32, %arg1: i32) -> (i32, i32) {
    %c0_i32 = arith.constant 0 : i32
    %c0_i32_0 = arith.constant 0 : i32
    return %c0_i32, %arg0 : i32, i32
  }
  func.func @transform_2(%arg0: i32, %arg1: i32) -> (i32, i32, i32) {
    %c0_i32 = arith.constant 0 : i32
    %c0_i32_0 = arith.constant 0 : i32
    return %arg1, %c0_i32, %arg0 : i32, i32, i32
  }
}

</mosaic_0001>

<llo_original>
// kernel: tpu_custom_call.1
$region0: #{tpu_custom_call.1}
  #allocation0 [shape = 'u32[]', space=smem, size = 0x4, offset = 0x4, fixed_abs, tag = 'smem constant byte address 0x4 - core index']
  #allocation1 [shape = 'u32[144,128]{1,0:T(1,128)}', space=vmem, size = 0x12000, scoped, tag = 'internal scratch']
  %s0 = inlined_call_operand.hbm [shape: f32[2,8,32], index: 0, kind: input, shape index: {}]
  %s1 = inlined_call_operand.hbm [shape: f32[8,32], index: 1, kind: input, shape index: {}]
  %s2 = inlined_call_operand.hbm [shape: f32[2,8,32], index: 2, kind: output, shape index: {}]
  %s3 = sld [smem:[#allocation0]]
  $region26: #{tpu_custom_call.1} parent=0
    _
  %s5 = ssub.s32 1, %s3
  %s6 = scalar_select 0, %s5, %s3
  $region1: #{tpu_custom_call.1} parent=0
    #allocation2 [shape = 'u8[8192]{0}', space=vmem, size = 0x2000, scoped, tag = 'input window, operand 0, single buffered']
    #allocation3 [shape = 's32[1]{0}', space=sflag, size = 0x4, scoped, tag = 'scoped memory for tpu_custom_call.1']
    #allocation4 [shape = 's32[1]{0}', space=sflag, size = 0x4, scoped, tag = 'scoped memory for tpu_custom_call.1']
    #allocation5 [shape = 'u8[4096]{0}', space=vmem, size = 0x1000, scoped, tag = 'input window, operand 1, single buffered']
    #allocation6 [shape = 's32[1]{0}', space=sflag, size = 0x4, scoped, tag = 'scoped memory for tpu_custom_call.1']
    #allocation7 [shape = 'u8[8192]{0}', space=vmem, size = 0x2000, scoped, tag = 'output window, operand 0, single buffered']
    %7 = vsyncpa [#allocation3], 0
    %8 = vsyncpa [#allocation6], 0
    %9 = vsyncpa [#allocation4], 0
    // Predicated region
    $region2: #{tpu_custom_call.1} parent=1 // pred_check
      _
    $region3: #{tpu_custom_call.1} parent=1 // pred_check_branch
      %11 = sbr.rel (0) target = $region5
    $region4: #{tpu_custom_call.1} parent=1 // pred_region
      %s13 = ssub.s32 256, 256
      %14 = vsyncadd [#allocation3], %s13
      %s15 = sshll.u32 [#allocation2], 4
      %s16 = int_to_ptr.vmem [resolvable:$true] %s15
      %21 = dma.hbm_to_vmem [thread:$0]  %s0, 256, %s16, [#allocation3], 128, 128, 8
    $region5: #{tpu_custom_call.1} parent=1 // pred_fallthru
      _
    // Predicated region
    $region6: #{tpu_custom_call.1} parent=1 // pred_check
      _
    $region7: #{tpu_custom_call.1} parent=1 // pred_check_branch
      %23 = sbr.rel (0) target = $region9
    $region8: #{tpu_custom_call.1} parent=1 // pred_region
      %s25 = ssub.s32 128, 128
      %26 = vsyncadd [#allocation6], %s25
      %s28 = sshll.u32 [#allocation5], 4
      %s29 = int_to_ptr.vmem [resolvable:$true] %s28
      %31 = dma.hbm_to_vmem [thread:$0]  %s1, 128, %s29, [#allocation6]
    $region9: #{tpu_custom_call.1} parent=1 // pred_fallthru
      _
    // Predicated region
    $region10: #{tpu_custom_call.1} parent=1 // pred_check
      _
    $region11: #{tpu_custom_call.1} parent=1 // pred_check_branch
      %33 = sbr.rel (0) target = $region13
    $region12: #{tpu_custom_call.1} parent=1 // pred_region
      %34 = dma.done [#allocation3], 256
    $region13: #{tpu_custom_call.1} parent=1 // pred_fallthru
      _
    // Predicated region
    $region14: #{tpu_custom_call.1} parent=1 // pred_check
      _
    $region15: #{tpu_custom_call.1} parent=1 // pred_check_branch
      %36 = sbr.rel (0) target = $region17
    $region16: #{tpu_custom_call.1} parent=1 // pred_region
      %37 = dma.done [#allocation6], 128
    $region17: #{tpu_custom_call.1} parent=1 // pred_fallthru
      _
    %v38 = vld [vmem:[#allocation2] sm:$0xff]
    %v39 = vld [vmem:[#allocation2 + $0x8] sm:$0xff]
    %v40 = vld [vmem:[#allocation5] sm:$0xff]
    %v41 = vadd.f32 %v38, %v40
    %v42 = vadd.f32 %v39, %v40
    %vm43 = vcmask 261120
    %44 = vst.msk [vmem:[#allocation7] sm:$0xff] %vm43, %v41
    %45 = vst.msk [vmem:[#allocation7 + $0x8] sm:$0xff] %vm43, %v42
    // Predicated region
    $region18: #{tpu_custom_call.1} parent=1 // pred_check
      _
    $region19: #{tpu_custom_call.1} parent=1 // pred_check_branch
      %47 = sbr.rel (0) target = $region21
    $region20: #{tpu_custom_call.1} parent=1 // pred_region
      %s49 = ssub.s32 256, 256
      %50 = vsyncadd [#allocation4], %s49
      %s51 = sshll.u32 [#allocation7], 4
      %s52 = int_to_ptr.vmem [resolvable:$true] %s51
      %57 = dma.vmem_to_hbm [thread:$0]  %s52, 256, %s2, [#allocation4], 128, 128, 8
    $region21: #{tpu_custom_call.1} parent=1 // pred_fallthru
      _
    // Predicated region
    $region22: #{tpu_custom_call.1} parent=1 // pred_check
      _
    $region23: #{tpu_custom_call.1} parent=1 // pred_check_branch
      %59 = sbr.rel (0) target = $region25
    $region24: #{tpu_custom_call.1} parent=1 // pred_region
      %60 = dma.done [#allocation4], 256
    $region25: #{tpu_custom_call.1} parent=1 // pred_fallthru
      _
    %61 = vsyncpa [#allocation3], 1
    %62 = vsyncpa [#allocation6], 1
    %63 = vsyncpa [#allocation4], 1

</llo_original>
